<compile_context>
chip_gen: v6e
topology: v6e:2x2x1
jax: 0.10.0
libtpu: 0.0.40
codegen_flags: <defaults>
</compile_context>

<pallas_src>
import functools
import math

import numpy as np

import jax
import jax.numpy as jnp
from jax.experimental import pallas as pl
from jax.experimental.pallas import tpu as pltpu


# ---------------------------------------------------------------------------
# Rational Lanczos lgamma (fallback path for large total_trials)
# ---------------------------------------------------------------------------
_LANCZOS_C = (
    0.99999999999980993,
    676.5203681218851,
    -1259.1392167224028,
    771.32342877765313,
    -176.61502916214059,
    12.507343278686905,
    -0.13857109526572012,
    9.9843695780195716e-6,
    1.5056327351493116e-7,
)
_HALF_LOG_2PI = 0.5 * math.log(2.0 * math.pi)


def _lanczos_rational_coeffs():
    """Lanczos series a(z) = c0 + sum_k c_k/(x+k) as Num(x)/Den(x), x = z-1.

    Den(x) = prod_k (x+k); the division never happens in-kernel because the
    denominator is folded into the final log (log Num - log Den), eliminating
    all EUP reciprocals.
    """
    den = np.poly1d([1.0])
    for k in range(1, 9):
        den = den * np.poly1d([1.0, float(k)])
    num = _LANCZOS_C[0] * den
    for k in range(1, 9):
        part = np.poly1d([1.0])
        for j in range(1, 9):
            if j != k:
                part = part * np.poly1d([1.0, float(j)])
        num = num + _LANCZOS_C[k] * part
    return (tuple(float(c) for c in num.coeffs),
            tuple(float(c) for c in den.coeffs))


_LANCZOS_NUM, _LANCZOS_DEN = _lanczos_rational_coeffs()


def _horner(x, coeffs):
    acc = jnp.float32(coeffs[0])
    for c in coeffs[1:]:
        acc = acc * x + jnp.float32(c)
    return acc


def _lgamma_ge1(z):
    """lgamma(z) for z >= 1 (no reflection), rational Lanczos, no reciprocals.

    f32-safe for z up to ~6e4 (Num/Den ~ (x+4.5)^8 stays below f32 max).
    """
    x = z - 1.0
    t = z + 6.5                       # z + g - 0.5, g = 7
    num = _horner(x, _LANCZOS_NUM)    # Horner on the VPU (free filler)
    den = _horner(x, _LANCZOS_DEN)
    return (_HALF_LOG_2PI + (z - 0.5) * jnp.log(t) - t
            + jnp.log(num) - jnp.log(den))


# ---------------------------------------------------------------------------
# Pallas kernel
# ---------------------------------------------------------------------------
def _bin_loss_kernel(probs_ref, obs_ref, out_ref, *, n_trials, lfn, lut,
                     tile_rows, steps, valid_elems):
    part = pl.program_id(0)     # "parallel" partition axis (TCs on v7x)
    step = pl.program_id(1)     # "arbitrary" sequential reduction axis

    @pl.when(step == 0)
    def _():
        out_ref[...] = jnp.zeros_like(out_ref)

    # Inputs are loaded in their native dtype and cast here (VPU filler).
    p = probs_ref[...].astype(jnp.float32)
    obs = obs_ref[...].astype(jnp.float32)

    n = jnp.float32(n_trials)
    n_minus_obs = n - obs                       # reused below

    if lut is not None:
        # Small integer N:  -log C(N, obs)  (also absorbs -lfn) via an
        # unrolled where-chain over the (N+1)-entry host table -> no lgamma.
        lg = jnp.float32(lut[-1])
        for k in range(len(lut) - 2, -1, -1):
            lg = jnp.where(obs <= k + 0.5, jnp.float32(lut[k]), lg)
    else:
        # Fallback: lgamma(obs+1) + lgamma(N-obs+1) - lgamma(N+1),
        # rational Lanczos (3 logs per lgamma, zero reciprocals).
        lg = (_lgamma_ge1(obs + 1.0) + _lgamma_ge1(n_minus_obs + 1.0)
              - jnp.float32(lfn))

    # nn.BCELoss clamps log outputs at -100; with mles = obs/N:
    #   N * BCE(p, obs/N) == -(obs*log(p) + (N - obs)*log(1-p))
    log_p = jnp.maximum(jnp.log(p), -100.0)
    log_1mp = jnp.maximum(jnp.log(1.0 - p), -100.0)
    loss = lg - (obs * log_p + n_minus_obs * log_1mp)

    def accumulate(vals):
        # Lane-parallel accumulation into the resident output block; the
        # cross-lane reduce to a scalar happens outside the kernel.
        out_ref[...] += vals.reshape(tile_rows // 8, 8, 128).sum(axis=0
                                     ).reshape(1, 8, 128)

    tile_elems = tile_rows * 128
    base = (part * steps + step) * tile_elems   # int32: wrapper asserts <2^31
    is_boundary = base + tile_elems > valid_elems

    @pl.when(jnp.logical_not(is_boundary))
    def _():
        accumulate(loss)

    @pl.when(is_boundary)                       # only the boundary tile masks
    def _():
        row = jax.lax.broadcasted_iota(jnp.int32, (tile_rows, 1), 0)
        lane = jax.lax.broadcasted_iota(jnp.int32, (1, 128), 1)
        local = row * 128 + lane
        accumulate(jnp.where(local < valid_elems - base, loss, 0.0))


# ---------------------------------------------------------------------------
# Wrapper
# ---------------------------------------------------------------------------
def _round_up(x, a):
    return -(-x // a) * a


def _sublane_multiple(dtype):
    # Sub-32-bit dtypes pack along sublanes; keep row blocks aligned so the
    # (8,128)/(16,128)/(32,128) native tiling is respected.
    return max(8, 32 // max(1, jnp.dtype(dtype).itemsize))


def _num_partitions_default():
    try:
        info = pltpu.get_tpu_info()
        for attr in ("num_cores", "core_count", "num_tensorcores"):
            v = getattr(info, attr, None)
            if v:
                return max(1, int(v))
    except Exception:
        pass
    return 2   # harmless extra outer iteration on 1-TC chips; 2x on v7x


def bin_loss(probs, obs, total_trials, reduction="mean", *,
             tile_rows=2048, num_partitions=None, lut_max_trials=64):
    if reduction not in ("mean", "sum"):
        # TODO(synk): reduction='none' (per-element output) not implemented.
        raise NotImplementedError("only reduction='mean'/'sum' supported")
    assert probs.shape == obs.shape

    total = int(probs.size)
    # Native dtypes all the way to the kernel; pad only to the next multiple
    # of 128 lanes, and only when actually needed.
    flat_p = probs.reshape(-1)
    flat_o = obs.reshape(-1)
    m = -(-total // 128)
    pad = m * 128 - total
    if pad:
        flat_p = jnp.pad(flat_p, (0, pad))
        flat_o = jnp.pad(flat_o, (0, pad))
    p2 = flat_p.reshape(m, 128)
    o2 = flat_o.reshape(m, 128)

    row_align = max(_sublane_multiple(p2.dtype), _sublane_multiple(o2.dtype))
    if m < row_align:                       # tiny inputs: round rows up
        p2 = jnp.pad(p2, ((0, row_align - m), (0, 0)))
        o2 = jnp.pad(o2, ((0, row_align - m), (0, 0)))
        m = row_align

    parts = int(num_partitions) if num_partitions else _num_partitions_default()
    parts = max(1, parts)
    # Shrink the tile if needed so every partition (TensorCore) gets work.
    per_part_rows = -(-m // parts)
    tile_rows = max(row_align,
                    min(_round_up(int(tile_rows), row_align),
                        _round_up(per_part_rows, row_align)))
    nblocks = -(-m // tile_rows)
    parts = min(parts, nblocks)
    steps = -(-nblocks // parts)

    # In-kernel boundary mask uses int32 flat offsets.
    assert parts * steps * tile_rows * 128 < 2 ** 31, (
        "inputs with >= 2**31 elements are not supported")

    n_f = float(total_trials)
    lfn = math.lgamma(n_f + 1.0)
    lut = None
    if n_f.is_integer() and 0 <= n_f <= lut_max_trials:
        # -log C(N,k) table (absorbs lfn): removes all lgamma transcendentals.
        lut = tuple(math.lgamma(k + 1.0) + math.lgamma(n_f - k + 1.0) - lfn
                    for k in range(int(n_f) + 1))

    kernel = functools.partial(
        _bin_loss_kernel, n_trials=n_f, lfn=lfn, lut=lut,
        tile_rows=tile_rows, steps=steps, valid_elems=total)

    # Clamp the block index so redundant trailing steps re-read a valid block
    # (they are fully masked in-kernel) instead of running off the array.
    in_map = lambda pi, si: (jnp.minimum(pi * steps + si, nblocks - 1), 0)

    partials = pl.pallas_call(
        kernel,
        out_shape=jax.ShapeDtypeStruct((parts, 8, 128), jnp.float32),
        grid_spec=pltpu.PrefetchScalarGridSpec(
            num_scalar_prefetch=0,
            grid=(parts, steps),
            in_specs=[
                pl.BlockSpec((tile_rows, 128), in_map),
                pl.BlockSpec((tile_rows, 128), in_map),
            ],
            out_specs=pl.BlockSpec((1, 8, 128), lambda pi, si: (pi, 0, 0)),
        ),
        compiler_params=pltpu.CompilerParams(
            dimension_semantics=("parallel", "arbitrary")),
    )(p2, o2)

    total_sum = jnp.sum(partials)           # tiny final cross-lane reduce
    if reduction == "mean":
        return total_sum / jnp.float32(total)
    return total_sum


# ---------------------------------------------------------------------------
# Reference (plain JAX) for validation
# ---------------------------------------------------------------------------
def bin_loss_ref(probs, obs, total_trials, reduction="mean"):
    n = float(total_trials)
    probs = probs.astype(jnp.float32)
    obs = obs.astype(jnp.float32)
    mles = obs / n
    lfobs = jax.lax.lgamma(obs + 1.0)
    lfobsc = jax.lax.lgamma(n - obs + 1.0)
    lfn = math.lgamma(n + 1.0)
    log_p = jnp.maximum(jnp.log(probs), -100.0)
    log_1mp = jnp.maximum(jnp.log(1.0 - probs), -100.0)
    bce = -(mles * log_p + (1.0 - mles) * log_1mp)
    loss = lfobs + lfobsc - lfn + n * bce
    return jnp.mean(loss) if reduction == "mean" else jnp.sum(loss)


if __name__ == "__main__":
    key = jax.random.PRNGKey(0)
    k1, k2, k3, k4, k5, k6 = jax.random.split(key, 6)

    total_trials = 10

    # Small NCHW example consistent with the module's expected inputs (LUT path).
    B, C, H, W = 2, 4, 16, 16
    probs = jax.random.uniform(k1, (B, C, H, W), jnp.float32,
                               minval=0.05, maxval=0.95)
    obs = jax.random.randint(k2, (B, C, H, W), 0, total_trials + 1
                             ).astype(jnp.float32)
    out = jax.block_until_ready(bin_loss(probs, obs, total_trials, "mean"))
    ref = bin_loss_ref(probs, obs, total_trials, "mean")
    assert jnp.allclose(out, ref, rtol=1e-4, atol=1e-4), (out, ref)

    # Multi-step + multi-partition accumulation ('sum', small tiles); obs kept
    # in its native int32 dtype (cast to f32 happens inside the kernel).
    probs2 = jax.random.uniform(k3, (2, 4, 32, 32), jnp.float32,
                                minval=0.05, maxval=0.95)
    obs2 = jax.random.randint(k4, (2, 4, 32, 32), 0, total_trials + 1)
    out2 = jax.block_until_ready(
        bin_loss(probs2, obs2, total_trials, "sum", tile_rows=16))
    ref2 = bin_loss_ref(probs2, obs2, total_trials, "sum")
    assert jnp.allclose(out2, ref2, rtol=1e-4, atol=1e-2), (out2, ref2)

    # Padded / boundary-masked tail (size not a multiple of 128).
    probs3 = jax.random.uniform(k5, (3, 5, 7, 11), jnp.float32,
                                minval=0.05, maxval=0.95)
    obs3 = jax.random.randint(k6, (3, 5, 7, 11), 0, total_trials + 1
                              ).astype(jnp.float32)
    out3 = jax.block_until_ready(bin_loss(probs3, obs3, total_trials, "mean"))
    ref3 = bin_loss_ref(probs3, obs3, total_trials, "mean")
    assert jnp.allclose(out3, ref3, rtol=1e-4, atol=1e-4), (out3, ref3)

    # Force the rational-Lanczos fallback (used when total_trials is large).
    out4 = jax.block_until_ready(
        bin_loss(probs, obs, total_trials, "mean", lut_max_trials=0))
    assert jnp.allclose(out4, ref, rtol=1e-4, atol=1e-3), (out4, ref)

    print("KERNEL_OK")
</pallas_src>

<mosaic_0001>
module attributes {stable_mosaic.version = 11 : i64} {
  func.func @_bin_loss_kernel(%arg0: i32, %arg1: i32, %arg2: memref<8x128xf32, #tpu.memory_space<vmem>>, %arg3: memref<8x128xf32, #tpu.memory_space<vmem>>, %arg4: memref<1x8x128xf32, #tpu.memory_space<vmem>>) attributes {dimension_semantics = [#tpu.dimension_semantics<parallel>, #tpu.dimension_semantics<arbitrary>], iteration_bounds = array<i64: 2, 1>, scalar_prefetch = 0 : i64, scratch_operands = 0 : i64, tpu.core_type = #tpu.core_type<tc>, window_params = [{transform_indices = @transform_0, window_bounds = array<i64: 8, 128>}, {transform_indices = @transform_1, window_bounds = array<i64: 8, 128>}, {transform_indices = @transform_2, window_bounds = array<i64: 1, 8, 128>}]} {
    %c0_i32 = arith.constant 0 : i32
    %0 = arith.cmpi eq, %arg1, %c0_i32 : i32
    %1 = arith.extui %0 : i1 to i32
    %c0_i32_0 = arith.constant 0 : i32
    %2 = arith.cmpi ne, %1, %c0_i32_0 : i32
    scf.if %2 {
      %cst_31 = arith.constant 0.000000e+00 : f32
      %70 = vector.broadcast %cst_31 : f32 to vector<1x8x128xf32>
      %c0_32 = arith.constant 0 : index
      %c0_33 = arith.constant 0 : index
      %c0_34 = arith.constant 0 : index
      %71 = vector.load %arg4[%c0_32, %c0_33, %c0_34] : memref<1x8x128xf32, #tpu.memory_space<vmem>>, vector<1x8x128xf32>
      tpu.vector_store %arg4[%c0_32, %c0_33, %c0_34], %70 {strides = array<i32>} : memref<1x8x128xf32, #tpu.memory_space<vmem>>, vector<1x8x128xf32>,
    } else {
    }
    %c0 = arith.constant 0 : index
    %c0_1 = arith.constant 0 : index
    %3 = vector.load %arg2[%c0, %c0_1] : memref<8x128xf32, #tpu.memory_space<vmem>>, vector<8x128xf32>
    %c0_2 = arith.constant 0 : index
    %c0_3 = arith.constant 0 : index
    %4 = vector.load %arg3[%c0_2, %c0_3] : memref<8x128xf32, #tpu.memory_space<vmem>>, vector<8x128xf32>
    %cst = arith.constant 1.000000e+01 : f32
    %5 = vector.broadcast %cst : f32 to vector<8x128xf32>
    %6 = arith.subf %5, %4 : vector<8x128xf32>
    %cst_4 = arith.constant 9.500000e+00 : f32
    %7 = vector.broadcast %cst_4 : f32 to vector<8x128xf32>
    %8 = arith.cmpf ole, %4, %7 : vector<8x128xf32>
    %cst_5 = arith.constant -2.30258512 : f32
    %cst_6 = arith.constant 0.000000e+00 : f32
    %9 = vector.broadcast %cst_5 : f32 to vector<8x128xf32>
    %10 = vector.broadcast %cst_6 : f32 to vector<8x128xf32>
    %11 = arith.select %8, %9, %10 : vector<8x128xi1>, vector<8x128xf32>
    %cst_7 = arith.constant 8.500000e+00 : f32
    %12 = vector.broadcast %cst_7 : f32 to vector<8x128xf32>
    %13 = arith.cmpf ole, %4, %12 : vector<8x128xf32>
    %cst_8 = arith.constant -3.80666256 : f32
    %14 = vector.broadcast %cst_8 : f32 to vector<8x128xf32>
    %15 = arith.select %13, %14, %11 : vector<8x128xi1>, vector<8x128xf32>
    %cst_9 = arith.constant 7.500000e+00 : f32
    %16 = vector.broadcast %cst_9 : f32 to vector<8x128xf32>
    %17 = arith.cmpf ole, %4, %16 : vector<8x128xf32>
    %cst_10 = arith.constant -4.7874918 : f32
    %18 = vector.broadcast %cst_10 : f32 to vector<8x128xf32>
    %19 = arith.select %17, %18, %15 : vector<8x128xi1>, vector<8x128xf32>
    %cst_11 = arith.constant 6.500000e+00 : f32
    %20 = vector.broadcast %cst_11 : f32 to vector<8x128xf32>
    %21 = arith.cmpf ole, %4, %20 : vector<8x128xf32>
    %cst_12 = arith.constant -5.34710741 : f32
    %22 = vector.broadcast %cst_12 : f32 to vector<8x128xf32>
    %23 = arith.select %21, %22, %19 : vector<8x128xi1>, vector<8x128xf32>
    %cst_13 = arith.constant 5.500000e+00 : f32
    %24 = vector.broadcast %cst_13 : f32 to vector<8x128xf32>
    %25 = arith.cmpf ole, %4, %24 : vector<8x128xf32>
    %cst_14 = arith.constant -5.52942896 : f32
    %26 = vector.broadcast %cst_14 : f32 to vector<8x128xf32>
    %27 = arith.select %25, %26, %23 : vector<8x128xi1>, vector<8x128xf32>
    %cst_15 = arith.constant 4.500000e+00 : f32
    %28 = vector.broadcast %cst_15 : f32 to vector<8x128xf32>
    %29 = arith.cmpf ole, %4, %28 : vector<8x128xf32>
    %cst_16 = arith.constant -5.34710741 : f32
    %30 = vector.broadcast %cst_16 : f32 to vector<8x128xf32>
    %31 = arith.select %29, %30, %27 : vector<8x128xi1>, vector<8x128xf32>
    %cst_17 = arith.constant 3.500000e+00 : f32
    %32 = vector.broadcast %cst_17 : f32 to vector<8x128xf32>
    %33 = arith.cmpf ole, %4, %32 : vector<8x128xf32>
    %cst_18 = arith.constant -4.7874918 : f32
    %34 = vector.broadcast %cst_18 : f32 to vector<8x128xf32>
    %35 = arith.select %33, %34, %31 : vector<8x128xi1>, vector<8x128xf32>
    %cst_19 = arith.constant 2.500000e+00 : f32
    %36 = vector.broadcast %cst_19 : f32 to vector<8x128xf32>
    %37 = arith.cmpf ole, %4, %36 : vector<8x128xf32>
    %cst_20 = arith.constant -3.80666256 : f32
    %38 = vector.broadcast %cst_20 : f32 to vector<8x128xf32>
    %39 = arith.select %37, %38, %35 : vector<8x128xi1>, vector<8x128xf32>
    %cst_21 = arith.constant 1.500000e+00 : f32
    %40 = vector.broadcast %cst_21 : f32 to vector<8x128xf32>
    %41 = arith.cmpf ole, %4, %40 : vector<8x128xf32>
    %cst_22 = arith.constant -2.30258512 : f32
    %42 = vector.broadcast %cst_22 : f32 to vector<8x128xf32>
    %43 = arith.select %41, %42, %39 : vector<8x128xi1>, vector<8x128xf32>
    %cst_23 = arith.constant 5.000000e-01 : f32
    %44 = vector.broadcast %cst_23 : f32 to vector<8x128xf32>
    %45 = arith.cmpf ole, %4, %44 : vector<8x128xf32>
    %cst_24 = arith.constant 0.000000e+00 : f32
    %46 = vector.broadcast %cst_24 : f32 to vector<8x128xf32>
    %47 = arith.select %45, %46, %43 : vector<8x128xi1>, vector<8x128xf32>
    %48 = math.log %3 : vector<8x128xf32>
    %cst_25 = arith.constant -1.000000e+02 : f32
    %49 = vector.broadcast %cst_25 : f32 to vector<8x128xf32>
    %50 = arith.maximumf %48, %49 : vector<8x128xf32>
    %cst_26 = arith.constant 1.000000e+00 : f32
    %51 = vector.broadcast %cst_26 : f32 to vector<8x128xf32>
    %52 = arith.subf %51, %3 : vector<8x128xf32>
    %53 = math.log %52 : vector<8x128xf32>
    %cst_27 = arith.constant -1.000000e+02 : f32
    %54 = vector.broadcast %cst_27 : f32 to vector<8x128xf32>
    %55 = arith.maximumf %53, %54 : vector<8x128xf32>
    %56 = arith.mulf %4, %50 : vector<8x128xf32>
    %57 = arith.mulf %6, %55 : vector<8x128xf32>
    %58 = arith.addf %56, %57 : vector<8x128xf32>
    %59 = arith.subf %47, %58 : vector<8x128xf32>
    %c1_i32 = arith.constant 1 : i32
    %60 = arith.muli %arg0, %c1_i32 : i32
    %61 = arith.addi %60, %arg1 : i32
    %c1024_i32 = arith.constant 1024 : i32
    %62 = arith.muli %61, %c1024_i32 : i32
    %c1024_i32_28 = arith.constant 1024 : i32
    %63 = arith.addi %62, %c1024_i32_28 : i32
    %c2048_i32 = arith.constant 2048 : i32
    %64 = arith.cmpi sgt, %63, %c2048_i32 : i32
    %true = arith.constant true
    %65 = arith.xori %64, %true : i1
    %66 = arith.extui %65 : i1 to i32
    %c0_i32_29 = arith.constant 0 : i32
    %67 = arith.cmpi ne, %66, %c0_i32_29 : i32
    scf.if %67 {
      %c0_31 = arith.constant 0 : index
      %c0_32 = arith.constant 0 : index
      %c0_33 = arith.constant 0 : index
      %70 = vector.load %arg4[%c0_31, %c0_32, %c0_33] : memref<1x8x128xf32, #tpu.memory_space<vmem>>, vector<1x8x128xf32>
      %71 = vector.shape_cast %59 : vector<8x128xf32> to vector<1x8x128xf32>
      %cst_34 = arith.constant dense<0.000000e+00> : vector<8x128xf32>
      %72 = vector.multi_reduction <add>, %71, %cst_34 [0] : vector<1x8x128xf32> to vector<8x128xf32>
      %73 = vector.shape_cast %72 : vector<8x128xf32> to vector<1x8x128xf32>
      %74 = arith.addf %70, %73 : vector<1x8x128xf32>
      %c0_35 = arith.constant 0 : index
      %c0_36 = arith.constant 0 : index
      %c0_37 = arith.constant 0 : index
      %75 = vector.load %arg4[%c0_35, %c0_36, %c0_37] : memref<1x8x128xf32, #tpu.memory_space<vmem>>, vector<1x8x128xf32>
      tpu.vector_store %arg4[%c0_35, %c0_36, %c0_37], %74 {strides = array<i32>} : memref<1x8x128xf32, #tpu.memory_space<vmem>>, vector<1x8x128xf32>,
    } else {
    }
    %68 = arith.extui %64 : i1 to i32
    %c0_i32_30 = arith.constant 0 : i32
    %69 = arith.cmpi ne, %68, %c0_i32_30 : i32
    scf.if %69 {
      %70 = tpu.iota {dimensions = array<i32: 0>} : vector<8x1xi32>
      %71 = tpu.iota {dimensions = array<i32: 1>} : vector<1x128xi32>
      %c128_i32 = arith.constant 128 : i32
      %72 = vector.broadcast %c128_i32 : i32 to vector<8x1xi32>
      %73 = arith.muli %70, %72 : vector<8x1xi32>
      %74 = vector.broadcast %73 : vector<8x1xi32> to vector<8x128xi32>
      %75 = vector.broadcast %71 : vector<1x128xi32> to vector<8x128xi32>
      %76 = arith.addi %74, %75 : vector<8x128xi32>
      %c2048_i32_31 = arith.constant 2048 : i32
      %77 = arith.subi %c2048_i32_31, %62 : i32
      %78 = vector.broadcast %77 : i32 to vector<8x128xi32>
      %79 = arith.cmpi slt, %76, %78 : vector<8x128xi32>
      %cst_32 = arith.constant 0.000000e+00 : f32
      %80 = vector.broadcast %cst_32 : f32 to vector<8x128xf32>
      %81 = arith.select %79, %59, %80 : vector<8x128xi1>, vector<8x128xf32>
      %c0_33 = arith.constant 0 : index
      %c0_34 = arith.constant 0 : index
      %c0_35 = arith.constant 0 : index
      %82 = vector.load %arg4[%c0_33, %c0_34, %c0_35] : memref<1x8x128xf32, #tpu.memory_space<vmem>>, vector<1x8x128xf32>
      %83 = vector.shape_cast %81 : vector<8x128xf32> to vector<1x8x128xf32>
      %cst_36 = arith.constant dense<0.000000e+00> : vector<8x128xf32>
      %84 = vector.multi_reduction <add>, %83, %cst_36 [0] : vector<1x8x128xf32> to vector<8x128xf32>
      %85 = vector.shape_cast %84 : vector<8x128xf32> to vector<1x8x128xf32>
      %86 = arith.addf %82, %85 : vector<1x8x128xf32>
      %c0_37 = arith.constant 0 : index
      %c0_38 = arith.constant 0 : index
      %c0_39 = arith.constant 0 : index
      %87 = vector.load %arg4[%c0_37, %c0_38, %c0_39] : memref<1x8x128xf32, #tpu.memory_space<vmem>>, vector<1x8x128xf32>
      tpu.vector_store %arg4[%c0_37, %c0_38, %c0_39], %86 {strides = array<i32>} : memref<1x8x128xf32, #tpu.memory_space<vmem>>, vector<1x8x128xf32>,
    } else {
    }
    return
  }
  func.func @transform_0(%arg0: i32, %arg1: i32) -> (i32, i32) {
    %c1_i32 = arith.constant 1 : i32
    %0 = arith.muli %arg0, %c1_i32 : i32
    %1 = arith.addi %0, %arg1 : i32
    %c1_i32_0 = arith.constant 1 : i32
    %2 = arith.minsi %1, %c1_i32_0 : i32
    %c0_i32 = arith.constant 0 : i32
    %c0_i32_1 = arith.constant 0 : i32
    return %2, %c0_i32 : i32, i32
  }
  func.func @transform_1(%arg0: i32, %arg1: i32) -> (i32, i32) {
    %c1_i32 = arith.constant 1 : i32
    %0 = arith.muli %arg0, %c1_i32 : i32
    %1 = arith.addi %0, %arg1 : i32
    %c1_i32_0 = arith.constant 1 : i32
    %2 = arith.minsi %1, %c1_i32_0 : i32
    %c0_i32 = arith.constant 0 : i32
    %c0_i32_1 = arith.constant 0 : i32
    return %2, %c0_i32 : i32, i32
  }
  func.func @transform_2(%arg0: i32, %arg1: i32) -> (i32, i32, i32) {
    %c0_i32 = arith.constant 0 : i32
    %c0_i32_0 = arith.constant 0 : i32
    %c0_i32_1 = arith.constant 0 : i32
    return %arg0, %c0_i32, %c0_i32_0 : i32, i32, i32
  }
}

</mosaic_0001>

<llo_original>
// kernel: tpu_custom_call.1
$region0: #{tpu_custom_call.1}
  #allocation0 [shape = 'u32[]', space=smem, size = 0x4, offset = 0x4, fixed_abs, tag = 'smem constant byte address 0x4 - core index']
  #allocation1 [shape = 'u32[144,128]{1,0:T(1,128)}', space=vmem, size = 0x12000, scoped, tag = 'internal scratch']
  %s0 = inlined_call_operand.hbm [shape: f32[16,128], index: 0, kind: input, shape index: {}]
  %s1 = inlined_call_operand.hbm [shape: f32[16,128], index: 1, kind: input, shape index: {}]
  %s2 = inlined_call_operand.hbm [shape: f32[2,8,128], index: 2, kind: output, shape index: {}]
  %s3 = sld [smem:[#allocation0]]
  $region61: #{tpu_custom_call.1} parent=0
    _
  %s5 = ssub.s32 1, %s3
  %s6 = scalar_select 0, %s5, %s3
  $region1: #{tpu_custom_call.1} parent=0
    #allocation2 [shape = 'u8[8192]{0}', space=vmem, size = 0x2000, scoped, tag = 'input window, operand 0']
    #allocation3 [shape = 's32[2]{0}', space=sflag, size = 0x8, scoped, tag = 'scoped memory for tpu_custom_call.1']
    #allocation4 [shape = 's32[2]{0}', space=sflag, size = 0x8, scoped, tag = 'scoped memory for tpu_custom_call.1']
    #allocation5 [shape = 'u8[8192]{0}', space=vmem, size = 0x2000, scoped, tag = 'input window, operand 1']
    #allocation6 [shape = 's32[2]{0}', space=sflag, size = 0x8, scoped, tag = 'scoped memory for tpu_custom_call.1']
    #allocation7 [shape = 'u8[8192]{0}', space=vmem, size = 0x2000, scoped, tag = 'output window, operand 0']
    %7 = vsyncpa [#allocation3], 0
    %s8 = scalar_lea.sflag [#allocation3], 1
    %9 = vsyncpa %s8, 0
    %10 = vsyncpa [#allocation6], 0
    %s11 = scalar_lea.sflag [#allocation6], 1
    %12 = vsyncpa %s11, 0
    %13 = vsyncpa [#allocation4], 0
    %s14 = scalar_lea.sflag [#allocation4], 1
    %15 = vsyncpa %s14, 0
    loop: start=0, step=1, limit=4
    $region2: #{tpu_custom_call.1} parent=1 // loop_pre_header
      _
    $region3: #{tpu_custom_call.1} parent=1 // loop_header
      %s17 = sphi 0, %s21
      %p18 = scmp.ge.s32.totalorder %s17, 4
      %s24 = sphi 0, %s36
      %s25 = sphi 0, %s32
      %s26 = sphi 0, %s24
      %s27 = sphi 0, %s25
      %s28 = sphi 0, %s26
      %s29 = sphi 0, %s27
      %s45 = sphi 0, %s47
      %s48 = sphi 0, %s45
      %s49 = sphi 0, %s48
      %s65 = sphi 0, %s49
      %s77 = sphi 0, %s79
      %s80 = sphi 0, %s77
      %s81 = sphi 0, %s80
      %s97 = sphi 0, %s81
      %s103 = sphi 0, %s105
      %s106 = sphi 0, %s103
      %s107 = sphi 0, %s106
      %s123 = sphi 0, %s107
    $region4: #{tpu_custom_call.1} parent=1 // loop_header_branch
      %20 = sbr.rel (%p18) target = $region8
    $region5: #{tpu_custom_call.1} parent=1 // loop_body
      %s22 = ssub.s32 %s17, 1
      %s23 = ssub.s32 %s17, 2
      %s30 = sadd.s32 1, %s25
      %p31 = scmp.ge.s32.totalorder %s30, 1
      %s32 = scalar_select %p31, 0, %s30
      %s33 = sadd.s32 1, %s24
      %s34 = scalar_select %p31, %s33, %s24
      %p35 = scmp.ge.s32.totalorder %s34, 2
      %s36 = scalar_select %p35, 0, %s34
      %s37 = sadd.s32 %s24, %s25
      %p38 = scmp.lt.s32.totalorder %s37, 1
      %s39 = scalar_select %p38, %s37, 1
      %s40 = sadd.s32 %s36, %s32
      %p41 = scmp.lt.s32.totalorder %s40, 1
      %s42 = scalar_select %p41, %s40, 1
      %s43 = ssub.s32 %s39, %s42
      %p44 = scmp.eq.s32.totalorder %s43, 0
      %s46 = sadd.s32 %s45, 1
      %s47 = scalar_select %p44, %s45, %s46
      %p50 = pneg %p44
      %p51 = scmp.eq.s32.totalorder %s17, 1
      %p52 = por %p50, %p51
      %p53 = scmp.ne.s32.totalorder %s45, %s48
      %p54 = scmp.eq.s32.totalorder %s17, 0
      %p55 = por %p53, %p54
      %p56 = scmp.ne.s32.totalorder %s45, %s48
      %p57 = scmp.eq.s32.totalorder %s22, 1
      %p58 = por %p56, %p57
      %p59 = scmp.ne.s32.totalorder %s48, %s49
      %p60 = scmp.eq.s32.totalorder %s22, 0
      %p61 = por %p59, %p60
      %p62 = scmp.ne.s32.totalorder %s48, %s49
      %p63 = scmp.eq.s32.totalorder %s23, 1
      %p64 = por %p62, %p63
      %p66 = scmp.ne.s32.totalorder %s49, %s65
      %p67 = scmp.eq.s32.totalorder %s23, 0
      %p68 = por %p66, %p67
      %s69 = sadd.s32 %s24, %s25
      %p70 = scmp.lt.s32.totalorder %s69, 1
      %s71 = scalar_select %p70, %s69, 1
      %s72 = sadd.s32 %s36, %s32
      %p73 = scmp.lt.s32.totalorder %s72, 1
      %s74 = scalar_select %p73, %s72, 1
      %s75 = ssub.s32 %s71, %s74
      %p76 = scmp.eq.s32.totalorder %s75, 0
      %s78 = sadd.s32 %s77, 1
      %s79 = scalar_select %p76, %s77, %s78
      %p82 = pneg %p76
      %p83 = scmp.eq.s32.totalorder %s17, 1
      %p84 = por %p82, %p83
      %p85 = scmp.ne.s32.totalorder %s77, %s80
      %p86 = scmp.eq.s32.totalorder %s17, 0
      %p87 = por %p85, %p86
      %p88 = scmp.ne.s32.totalorder %s77, %s80
      %p89 = scmp.eq.s32.totalorder %s22, 1
      %p90 = por %p88, %p89
      %p91 = scmp.ne.s32.totalorder %s80, %s81
      %p92 = scmp.eq.s32.totalorder %s22, 0
      %p93 = por %p91, %p92
      %p94 = scmp.ne.s32.totalorder %s80, %s81
      %p95 = scmp.eq.s32.totalorder %s23, 1
      %p96 = por %p94, %p95
      %p98 = scmp.ne.s32.totalorder %s81, %s97
      %p99 = scmp.eq.s32.totalorder %s23, 0
      %p100 = por %p98, %p99
      %s101 = ssub.s32 %s24, %s36
      %p102 = scmp.eq.s32.totalorder %s101, 0
      %s104 = sadd.s32 %s103, 1
      %s105 = scalar_select %p102, %s103, %s104
      %p108 = pneg %p102
      %p109 = scmp.eq.s32.totalorder %s17, 1
      %p110 = por %p108, %p109
      %p111 = scmp.ne.s32.totalorder %s103, %s106
      %p112 = scmp.eq.s32.totalorder %s17, 0
      %p113 = por %p111, %p112
      %p114 = scmp.ne.s32.totalorder %s103, %s106
      %p115 = scmp.eq.s32.totalorder %s22, 1
      %p116 = por %p114, %p115
      %p117 = scmp.ne.s32.totalorder %s106, %s107
      %p118 = scmp.eq.s32.totalorder %s22, 0
      %p119 = por %p117, %p118
      %p120 = scmp.ne.s32.totalorder %s106, %s107
      %p121 = scmp.eq.s32.totalorder %s23, 1
      %p122 = por %p120, %p121
      %p124 = scmp.ne.s32.totalorder %s107, %s123
      %p125 = scmp.eq.s32.totalorder %s23, 0
      %p126 = por %p124, %p125
      %p127 = scmp.le.s32.totalorder 1, %s17
      %p128 = scmp.lt.s32.totalorder %s17, 3
      %p129 = pnand %p127, %p128
      %p130 = pneg %p129
      // Predicated region
      $region9: #{tpu_custom_call.1} parent=5 // pred_check
        _
      $region10: #{tpu_custom_call.1} parent=5 // pred_check_branch
        %132 = sbr.rel (%p129) target = $region12
      $region11: #{tpu_custom_call.1} parent=5 // pred_region
        %s133 = ssub.s32 %s17, 1
      $region12: #{tpu_custom_call.1} parent=5 // pred_fallthru
        _
      %p134 = scmp.lt.s32.totalorder %s17, 2
      // Predicated region
      $region13: #{tpu_custom_call.1} parent=5 // pred_check
        %p135 = pneg %p134
      $region14: #{tpu_custom_call.1} parent=5 // pred_check_branch
        %137 = sbr.rel (%p135) target = $region16
      $region15: #{tpu_custom_call.1} parent=5 // pred_region
        // Predicated region
        $region17: #{tpu_custom_call.1} parent=15 // pred_check
          %p138 = pneg %p55
        $region18: #{tpu_custom_call.1} parent=15 // pred_check_branch
          %140 = sbr.rel (%p138) target = $region20
        $region19: #{tpu_custom_call.1} parent=15 // pred_region
          %s141 = sand.u32 %s45, 1
          %s142 = scalar_lea.sflag [#allocation3], %s141
          %s143 = sand.u32 %s45, 1
          %s144 = smul.addr %s143, 8
          %s145 = scalar_lea.vmem [#allocation2], %s144
          %s146 = sadd.s32 %s24, %s25
          %p147 = scmp.lt.s32.totalorder %s146, 1
          %s148 = scalar_select %p147, %s146, 1
          %s150 = ssub.s32 128, 128
          %151 = vsyncadd %s142, %s150
          %s152 = smul.addr %s148, 128
          %s153 = scalar_lea.hbm %s0, %s152
          %s155 = sshll.u32 %s145, 4
          %s156 = int_to_ptr.vmem [resolvable:$true] %s155
          %158 = dma.hbm_to_vmem [thread:$0]  %s153, 128, %s156, %s142
        $region20: #{tpu_custom_call.1} parent=15 // pred_fallthru
          _
        // Predicated region
        $region21: #{tpu_custom_call.1} parent=15 // pred_check
          %p159 = pneg %p87
        $region22: #{tpu_custom_call.1} parent=15 // pred_check_branch
          %161 = sbr.rel (%p159) target = $region24
        $region23: #{tpu_custom_call.1} parent=15 // pred_region
          %s162 = sand.u32 %s77, 1
          %s163 = scalar_lea.sflag [#allocation6], %s162
          %s164 = sand.u32 %s77, 1
          %s165 = smul.addr %s164, 8
          %s166 = scalar_lea.vmem [#allocation5], %s165
          %s167 = sadd.s32 %s24, %s25
          %p168 = scmp.lt.s32.totalorder %s167, 1
          %s169 = scalar_select %p168, %s167, 1
          %s171 = ssub.s32 128, 128
          %172 = vsyncadd %s163, %s171
          %s173 = smul.addr %s169, 128
          %s174 = scalar_lea.hbm %s1, %s173
          %s176 = sshll.u32 %s166, 4
          %s177 = int_to_ptr.vmem [resolvable:$true] %s176
          %179 = dma.hbm_to_vmem [thread:$0]  %s174, 128, %s177, %s163
        $region24: #{tpu_custom_call.1} parent=15 // pred_fallthru
          _
      $region16: #{tpu_custom_call.1} parent=5 // pred_fallthru
        _
      %p180 = scmp.le.s32.totalorder 1, %s17
      %p181 = scmp.lt.s32.totalorder %s17, 3
      %p182 = pnand %p180, %p181
      %p183 = pneg %p182
      // Predicated region
      $region25: #{tpu_custom_call.1} parent=5 // pred_check
        _
      $region26: #{tpu_custom_call.1} parent=5 // pred_check_branch
        %185 = sbr.rel (%p182) target = $region28
      $region27: #{tpu_custom_call.1} parent=5 // pred_region
        %s186 = ssub.s32 %s17, 1
        %s187 = sand.u32 %s48, 1
        %s188 = scalar_lea.sflag [#allocation3], %s187
        %s189 = sand.u32 %s48, 1
        %s190 = smul.addr %s189, 8
        %s191 = scalar_lea.vmem [#allocation2], %s190
        // Predicated region
        $region29: #{tpu_custom_call.1} parent=27 // pred_check
          %p192 = pneg %p61
        $region30: #{tpu_custom_call.1} parent=27 // pred_check_branch
          %194 = sbr.rel (%p192) target = $region32
        $region31: #{tpu_custom_call.1} parent=27 // pred_region
          %195 = dma.done %s188, 128
        $region32: #{tpu_custom_call.1} parent=27 // pred_fallthru
          _
        %s196 = sand.u32 %s80, 1
        %s197 = scalar_lea.sflag [#allocation6], %s196
        %s198 = sand.u32 %s80, 1
        %s199 = smul.addr %s198, 8
        %s200 = scalar_lea.vmem [#allocation5], %s199
        // Predicated region
        $region33: #{tpu_custom_call.1} parent=27 // pred_check
          %p201 = pneg %p93
        $region34: #{tpu_custom_call.1} parent=27 // pred_check_branch
          %203 = sbr.rel (%p201) target = $region36
        $region35: #{tpu_custom_call.1} parent=27 // pred_region
          %204 = dma.done %s197, 128
        $region36: #{tpu_custom_call.1} parent=27 // pred_fallthru
          _
        %s205 = sand.u32 %s48, 1
        %s206 = scalar_lea.sflag [#allocation3], %s205
        %s207 = sand.u32 %s48, 1
        %s208 = smul.addr %s207, 8
        %s209 = scalar_lea.vmem [#allocation2], %s208
        %p210 = pneg %p61
        %p211 = pneg %p58
        %s212 = sand.u32 %s80, 1
        %s213 = scalar_lea.sflag [#allocation6], %s212
        %s214 = sand.u32 %s80, 1
        %s215 = smul.addr %s214, 8
        %s216 = scalar_lea.vmem [#allocation5], %s215
        %p217 = pneg %p93
        %p218 = pneg %p90
        %p219 = pneg %p119
        %p220 = pneg %p116
        %s221 = sand.u32 %s106, 1
        %s222 = scalar_lea.sflag [#allocation4], %s221
        %s223 = sand.u32 %s106, 1
        %s224 = smul.addr %s223, 8
        %s225 = scalar_lea.vmem [#allocation7], %s224
        %s226 = sadd.s32 %s26, %s27
        %p227 = scmp.lt.s32.totalorder %s226, 1
        %s228 = scalar_select %p227, %s226, 1
        %s229 = sadd.s32 %s26, %s27
        %p230 = scmp.lt.s32.totalorder %s229, 1
        %s231 = scalar_select %p230, %s229, 1
        %p232 = scmp.eq.s32.totalorder %s27, 0
        // Predicated region
        $region37: #{tpu_custom_call.1} parent=27 // pred_check
          %p233 = pneg %p232
        $region38: #{tpu_custom_call.1} parent=27 // pred_check_branch
          %235 = sbr.rel (%p233) target = $region40
        $region39: #{tpu_custom_call.1} parent=27 // pred_region
          %236 = vst [vmem:[%s225] sm:$0xff] 0.0
        $region40: #{tpu_custom_call.1} parent=27 // pred_fallthru
          _
        %v237 = vld [vmem:[%s191] sm:$0xff]
        %v238 = vld [vmem:[%s200] sm:$0xff]
        %v239 = vsub.f32 10.0, %v238
        %vm240 = vcmp.le.f32.partialorder %v238, 9.5
        %v241 = vsel %vm240, -2.3025851, 0.0
        %vm242 = vcmp.le.f32.partialorder %v238, 8.5
        %v243 = vsel %vm242, -3.8066626, %v241
        %vm244 = vcmp.le.f32.partialorder %v238, 7.5
        %v245 = vsel %vm244, -4.787492, %v243
        %vm246 = vcmp.le.f32.partialorder %v238, 6.5
        %v247 = vsel %vm246, -5.3471074, %v245
        %vm248 = vcmp.le.f32.partialorder %v238, 5.5
        %v249 = vsel %vm248, -5.529429, %v247
        %vm250 = vcmp.le.f32.partialorder %v238, 4.5
        %v251 = vsel %vm250, -5.3471074, %v249
        %vm252 = vcmp.le.f32.partialorder %v238, 3.5
        %v253 = vsel %vm252, -4.787492, %v251
        %vm254 = vcmp.le.f32.partialorder %v238, 2.5
        %v255 = vsel %vm254, -3.8066626, %v253
        %vm256 = vcmp.le.f32.partialorder %v238, 1.5
        %v257 = vsel %vm256, -2.3025851, %v255
        %vm258 = vcmp.le.f32.partialorder %v238, 0.5
        %v259 = vsel %vm258, 0.0, %v257
        %v260 = vlog2.pop %v237
        %v261 = vmul.f32 %v260, 0.6931472
        %v262 = vmax.f32 %v261, -100.0
        %v263 = vsub.f32 1.0, %v237
        %v264 = vlog2.pop %v263
        %v265 = vmul.f32 %v264, 0.6931472
        %v266 = vmax.f32 %v265, -100.0
        %v267 = vmul.f32 %v238, %v262
        %v268 = vmul.f32 %v239, %v266
        %v269 = vadd.f32 %v267, %v268
        %v270 = vsub.f32 %v259, %v269
        %s271 = sadd.s32 %s26, %s27
        %s272 = smul.u32 %s271, 1024
        %s273 = sadd.s32 %s272, 1024
        %p274 = scmp.gt.s32.totalorder %s273, 2048
        %p275 = scmp.le.s32.totalorder %s273, 2048
        // Predicated region
        $region41: #{tpu_custom_call.1} parent=27 // pred_check
          %p276 = pneg %p275
        $region42: #{tpu_custom_call.1} parent=27 // pred_check_branch
          %278 = sbr.rel (%p276) target = $region44
        $region43: #{tpu_custom_call.1} parent=27 // pred_region
          %v279 = vld [vmem:[%s225] sm:$0xff]
          %v280 = vadd.f32 %v270, 0.0
          %v281 = vadd.f32 %v279, %v280
          %282 = vst [vmem:[%s225] sm:$0xff] %v281
        $region44: #{tpu_custom_call.1} parent=27 // pred_fallthru
          _
        // Predicated region
        $region45: #{tpu_custom_call.1} parent=27 // pred_check
          %p283 = pneg %p274
        $region46: #{tpu_custom_call.1} parent=27 // pred_check_branch
          %285 = sbr.rel (%p283) target = $region48
        $region47: #{tpu_custom_call.1} parent=27 // pred_region
          %v286 = vlaneseq
          %v287 = vshrl.u32 %v286, 7
          %v288 = vlaneseq
          %v289 = vand.u32 %v288, 127
          %v290 = vmul.u32 %v287, 128
          %v291 = vadd.s32 %v290, %v289
          %s292 = ssub.s32 2048, %s272
          %v293 = vstv %s292
          %vm294 = vcmp.lt.s32.totalorder %v291, %v293
          %v295 = vsel %vm294, %v270, 0.0
          %v296 = vld [vmem:[%s225] sm:$0xff]
          %v297 = vadd.f32 %v295, 0.0
          %v298 = vadd.f32 %v296, %v297
          %299 = vst [vmem:[%s225] sm:$0xff] %v298
        $region48: #{tpu_custom_call.1} parent=27 // pred_fallthru
          _
        %s300 = sand.u32 %s106, 1
        %s301 = scalar_lea.sflag [#allocation4], %s300
        %s302 = sand.u32 %s106, 1
        %s303 = smul.addr %s302, 8
        %s304 = scalar_lea.vmem [#allocation7], %s303
        // Predicated region
        $region49: #{tpu_custom_call.1} parent=27 // pred_check
          %p305 = pneg %p116
        $region50: #{tpu_custom_call.1} parent=27 // pred_check_branch
          %307 = sbr.rel (%p305) target = $region52
        $region51: #{tpu_custom_call.1} parent=27 // pred_region
          %s309 = ssub.s32 128, 128
          %310 = vsyncadd %s301, %s309
          %s311 = smul.addr %s26, 128
          %s312 = scalar_lea.hbm %s2, %s311
          %s314 = sshll.u32 %s304, 4
          %s315 = int_to_ptr.vmem [resolvable:$true] %s314
          %317 = dma.vmem_to_hbm [thread:$0]  %s315, 128, %s312, %s301
        $region52: #{tpu_custom_call.1} parent=27 // pred_fallthru
          _
      $region28: #{tpu_custom_call.1} parent=5 // pred_fallthru
        _
      %p318 = scmp.le.s32.totalorder 2, %s17
      // Predicated region
      $region53: #{tpu_custom_call.1} parent=5 // pred_check
        %p319 = pneg %p318
      $region54: #{tpu_custom_call.1} parent=5 // pred_check_branch
        %321 = sbr.rel (%p319) target = $region56
      $region55: #{tpu_custom_call.1} parent=5 // pred_region
        %s322 = ssub.s32 %s17, 2
        // Predicated region
        $region57: #{tpu_custom_call.1} parent=55 // pred_check
          %p323 = pneg %p122
        $region58: #{tpu_custom_call.1} parent=55 // pred_check_branch
          %325 = sbr.rel (%p323) target = $region60
        $region59: #{tpu_custom_call.1} parent=55 // pred_region
          %s326 = sand.u32 %s107, 1
          %s327 = scalar_lea.sflag [#allocation4], %s326
          %s328 = sand.u32 %s107, 1
          %s329 = smul.addr %s328, 8
          %s330 = scalar_lea.vmem [#allocation7], %s329
          %331 = dma.done %s327, 128
        $region60: #{tpu_custom_call.1} parent=55 // pred_fallthru
          _
      $region56: #{tpu_custom_call.1} parent=5 // pred_fallthru
        _
    $region6: #{tpu_custom_call.1} parent=1 // loop_footer
      %s21 = sadd.s32 1, %s17
    $region7: #{tpu_custom_call.1} parent=1 // loop_footer_branch
      %16 = sbr.rel target = $region3
    $region8: #{tpu_custom_call.1} parent=1 // loop_exit
      _
    %332 = vsyncpa [#allocation3], 1
    %s333 = scalar_lea.sflag [#allocation3], 1
    %334 = vsyncpa %s333, 1
    %335 = vsyncpa [#allocation6], 1
    %s336 = scalar_lea.sflag [#allocation6], 1
    %337 = vsyncpa %s336, 1
    %338 = vsyncpa [#allocation4], 1
    %s339 = scalar_lea.sflag [#allocation4], 1
    %340 = vsyncpa %s339, 1

</llo_original>
